<compile_context>
chip_gen: v5e
topology: v5e:2x2
jax: 0.10.0
libtpu: 0.0.40
codegen_flags: <defaults>
</compile_context>

<pallas_src>
import functools

import jax
import jax.numpy as jnp
from jax import lax
from jax.experimental import pallas as pl
from jax.experimental.pallas import tpu as pltpu

_NEG = -1e30  # finite "-inf": safe for masking + running-max init (no inf-inf NaNs)


def _round_up(x, m):
    return (x + m - 1) // m * m


def _cdiv(a, b):
    return (a + b - 1) // b


def _sublane(dtype):
    # Min sublane granule per element size: f32 -> 8, bf16 -> 16, int8/fp8 -> 32.
    return {4: 8, 2: 16, 1: 32}.get(jnp.dtype(dtype).itemsize, 8)


def _chip_params():
    """Per-generation tile caps + scoped-VMEM budget."""
    kind = ""
    vmem_bytes = 64 << 20
    try:
        kind = jax.devices()[0].device_kind.lower()
    except Exception:
        pass
    try:
        vmem_bytes = int(pltpu.get_tpu_info().vmem_capacity_bytes)
    except Exception:
        pass
    if "v5" in kind:
        # v5e: single vst slot, 128-deep MXU, ~820 GB/s HBM -> modest tiles.
        tq_cap, tk_cap = 512, 256
    elif vmem_bytes >= (100 << 20):
        # v6e-class (128 MiB VMEM): the most headroom of the three.
        tq_cap, tk_cap = 1024, 512
    else:
        # v7x (64 MiB per TensorCore) or unknown: stay well under budget.
        # (The "parallel" row axis feeds both TCs whenever n_pad/TQ >= 2.)
        tq_cap, tk_cap = 512, 512
    vmem_limit = max(32 << 20, min(vmem_bytes * 3 // 4, 96 << 20))
    return tq_cap, tk_cap, vmem_limit, kind


def _sft_kernel(xq_ref, xk_ref, sq_ref, sk_ref, o_ref,
                m_sc, l_sc, acc_sc, qn_sc, *, n_real, tk, need_mask):
    kv = pl.program_id(1)

    # ---- per row-tile init (kv == 0): running stats + pre-scaled query tile.
    @pl.when(kv == 0)
    def _():
        # sq = 1 / (sigma * clamp(||x||, 1e-12)), precomputed in the wrapper.
        qn_sc[...] = (xq_ref[...].astype(jnp.float32) * sq_ref[...]).astype(qn_sc.dtype)
        m_sc[...] = jnp.full_like(m_sc, _NEG)
        l_sc[...] = jnp.zeros_like(l_sc)
        acc_sc[...] = jnp.zeros_like(acc_sc)

    xk_raw = xk_ref[...]                                          # native dtype (values)
    # sk = 1 / clamp(||x||, 1e-12); normalise keys and cast to the score dtype.
    kn = (xk_raw.astype(jnp.float32) * sk_ref[...]).astype(qn_sc.dtype)

    # Scores: qn @ kn.T as a transpose-free dim-1 contraction, f32 MXU accumulation.
    s = lax.dot_general(qn_sc[...], kn,
                        dimension_numbers=(((1,), (1,)), ((), ())),
                        preferred_element_type=jnp.float32)       # [TQ, TK]

    if need_mask:  # static: only emitted when rows were padded
        col = lax.broadcasted_iota(jnp.int32, s.shape, 1) + kv * tk
        s = jnp.where(col < n_real, s, _NEG)

    # ---- online softmax update.
    m_prev = m_sc[...]
    m_new = jnp.maximum(m_prev, jnp.max(s, axis=1, keepdims=True))  # [TQ, 1]
    alpha = jnp.exp(m_prev - m_new)
    p = jnp.exp(s - m_new)                                          # [TQ, TK]
    l_sc[...] = alpha * l_sc[...] + jnp.sum(p, axis=1, keepdims=True)
    # Value matmul in the input's native dtype (bf16 input => bf16 MXU), f32 acc.
    acc_sc[...] = alpha * acc_sc[...] + jnp.dot(
        p.astype(xk_raw.dtype), xk_raw, preferred_element_type=jnp.float32)
    m_sc[...] = m_new

    # ---- finalize on the last kv tile.
    @pl.when(kv == pl.num_programs(1) - 1)
    def _():
        l = l_sc[...]
        inv_l = pl.reciprocal(l, approx=True)      # EUP slot
        inv_l = inv_l * (2.0 - l * inv_l)          # one Newton step -> ~f32-exact
        o_ref[...] = (acc_sc[...] * inv_l).astype(o_ref.dtype)


def sft_pallas(emb_org, sigma=0.1, *, score_in_bf16=True):
    n, d = emb_org.shape
    tq_cap, tk_cap, vmem_limit, kind = _chip_params()

    # Sublane granule: dtype-aware; >=16 whenever the bf16 query scratch is used.
    sub = max(_sublane(emb_org.dtype), 16 if score_in_bf16 else 8)

    # Lane padding for D (fill the 256-deep MXU on v6e/v7x when D really exceeds 128).
    d_pad = _round_up(d, 128)
    if d > 128 and "v5" not in kind:
        d_pad = _round_up(d, 256)

    # Balanced row tiling (minimal padding waste), then decouple TK (TK | TQ | n_pad).
    num_q = max(1, _cdiv(n, tq_cap))
    tq = _round_up(_cdiv(n, num_q), sub)
    n_pad = num_q * tq
    tk = tq
    while tk > tk_cap and tk % 2 == 0 and (tk // 2) % sub == 0:
        tk //= 2
    kv_steps = n_pad // tk

    x = emb_org
    if (n_pad, d_pad) != (n, d):
        x = jnp.pad(x, ((0, n_pad - n), (0, d_pad - d)))

    # Per-row inverse norms, hoisted out of the kernel (computed once, in f32).
    # min(rsqrt(sum(x^2)), 1e12) == 1 / clamp(||x||_2, 1e-12)  (monotone).
    xf = x.astype(jnp.float32)
    inv_norm = jnp.minimum(lax.rsqrt(jnp.sum(xf * xf, axis=1, keepdims=True)), 1e12)
    scale_k = inv_norm                                    # key side:   1 / ||x||
    scale_q = inv_norm * jnp.float32(1.0 / sigma)         # query side: 1 / (sigma*||x||)
    # sigma only enters the wrapper math above, so the kernel never recompiles per sigma.

    kernel = functools.partial(_sft_kernel, n_real=n, tk=tk, need_mask=(n_pad != n))

    xk_spec = pl.BlockSpec((tk, d_pad), lambda i, k: (k, 0))
    if kv_steps >= 4:
        # Deeper key/value pipeline once the bf16 MXU path could expose the key DMA.
        xk_spec = pl.BlockSpec((tk, d_pad), lambda i, k: (k, 0),
                               pipeline_mode=pl.Buffered(3))

    score_dtype = jnp.bfloat16 if score_in_bf16 else jnp.float32

    out = pl.pallas_call(
        kernel,
        out_shape=jax.ShapeDtypeStruct((n_pad, d_pad), emb_org.dtype),
        grid_spec=pltpu.PrefetchScalarGridSpec(
            num_scalar_prefetch=0,
            grid=(num_q, kv_steps),
            in_specs=[
                pl.BlockSpec((tq, d_pad), lambda i, k: (i, 0)),   # query rows
                xk_spec,                                          # key/value rows
                pl.BlockSpec((tq, 1), lambda i, k: (i, 0)),       # query scale
                pl.BlockSpec((tk, 1), lambda i, k: (k, 0)),       # key scale
            ],
            out_specs=pl.BlockSpec((tq, d_pad), lambda i, k: (i, 0)),
            scratch_shapes=[
                pltpu.VMEM((tq, 1), jnp.float32),        # running max m
                pltpu.VMEM((tq, 1), jnp.float32),        # running sum l
                pltpu.VMEM((tq, d_pad), jnp.float32),    # f32 output accumulator
                pltpu.VMEM((tq, d_pad), score_dtype),    # pre-scaled query tile
            ],
        ),
        compiler_params=pltpu.CompilerParams(
            dimension_semantics=("parallel", "arbitrary"),   # rows megacore-parallel
            vmem_limit_bytes=vmem_limit,
        ),
    )(x, x, scale_q, scale_k)

    if (n_pad, d_pad) != (n, d):
        out = out[:n, :d]
    return out


def sft_ref(emb_org, sigma=0.1):
    # Pure-JAX reference matching the PyTorch module (pinned to true-f32 matmuls).
    x = emb_org.astype(jnp.float32)
    nrm = jnp.maximum(jnp.sqrt(jnp.sum(x * x, axis=1, keepdims=True)), 1e-12)
    xn = x / nrm
    w = jnp.dot(xn, xn.T, precision=lax.Precision.HIGHEST) / sigma
    t = jax.nn.softmax(w, axis=1)
    return jnp.dot(t, x, precision=lax.Precision.HIGHEST).astype(emb_org.dtype)


if __name__ == "__main__":
    key = jax.random.PRNGKey(0)
    k1, k2 = jax.random.split(key)

    cases = [
        # Primary toy case consistent with the module: seq=8, hidden=32.
        jax.random.normal(k1, (8, 32), dtype=jnp.float32),
        # Unaligned case: exercises balanced ragged tiling + padding masks.
        jax.random.normal(k2, (272, 100), dtype=jnp.float32),
    ]

    for x in cases:
        ref = sft_ref(x, sigma=0.1)

        # Default path: bf16 score matmul (MXU-native), f32 accumulation/values.
        out = jax.block_until_ready(sft_pallas(x, sigma=0.1))
        assert out.shape == x.shape
        err = float(jnp.max(jnp.abs(out - ref)))
        assert jnp.allclose(out, ref, atol=2.5e-2, rtol=2.5e-2), \
            f"bf16-score path: max abs err {err}"

        # Strict-parity path: f32 score matmul, tight tolerance.
        out32 = jax.block_until_ready(sft_pallas(x, sigma=0.1, score_in_bf16=False))
        err32 = float(jnp.max(jnp.abs(out32 - ref)))
        assert jnp.allclose(out32, ref, atol=2e-3, rtol=2e-3), \
            f"f32-score path: max abs err {err32}"

    print("KERNEL_OK")
</pallas_src>

<mosaic_0001>
module attributes {stable_mosaic.version = 11 : i64} {
  func.func @_sft_kernel(%arg0: i32, %arg1: i32, %arg2: memref<16x128xf32, #tpu.memory_space<vmem>>, %arg3: memref<16x128xf32, #tpu.memory_space<vmem>>, %arg4: memref<16x1xf32, #tpu.memory_space<vmem>>, %arg5: memref<16x1xf32, #tpu.memory_space<vmem>>, %arg6: memref<16x128xf32, #tpu.memory_space<vmem>>, %arg7: memref<16x1xf32, #tpu.memory_space<vmem>>, %arg8: memref<16x1xf32, #tpu.memory_space<vmem>>, %arg9: memref<16x128xf32, #tpu.memory_space<vmem>>, %arg10: memref<16x128xbf16, #tpu.memory_space<vmem>>) attributes {dimension_semantics = [#tpu.dimension_semantics<parallel>, #tpu.dimension_semantics<arbitrary>], iteration_bounds = array<i64: 1, 1>, scalar_prefetch = 0 : i64, scratch_operands = 4 : i64, tpu.core_type = #tpu.core_type<tc>, window_params = [{transform_indices = @transform_0, window_bounds = array<i64: 16, 128>}, {transform_indices = @transform_1, window_bounds = array<i64: 16, 128>}, {transform_indices = @transform_2, window_bounds = array<i64: 16, 1>}, {transform_indices = @transform_3, window_bounds = array<i64: 16, 1>}, {transform_indices = @transform_4, window_bounds = array<i64: 16, 128>}]} {
    %c0_i32 = arith.constant 0 : i32
    %0 = arith.cmpi eq, %arg1, %c0_i32 : i32
    %1 = arith.extui %0 : i1 to i32
    %c0_i32_0 = arith.constant 0 : i32
    %2 = arith.cmpi ne, %1, %c0_i32_0 : i32
    scf.if %2 {
      %c0_24 = arith.constant 0 : index
      %c0_25 = arith.constant 0 : index
      %43 = vector.load %arg2[%c0_24, %c0_25] : memref<16x128xf32, #tpu.memory_space<vmem>>, vector<16x128xf32>
      %c0_26 = arith.constant 0 : index
      %c0_27 = arith.constant 0 : index
      %44 = vector.load %arg4[%c0_26, %c0_27] : memref<16x1xf32, #tpu.memory_space<vmem>>, vector<16x1xf32>
      %45 = vector.broadcast %44 : vector<16x1xf32> to vector<16x128xf32>
      %46 = arith.mulf %43, %45 : vector<16x128xf32>
      %47 = arith.truncf %46 : vector<16x128xf32> to vector<16x128xbf16>
      %c0_28 = arith.constant 0 : index
      %c0_29 = arith.constant 0 : index
      %48 = vector.load %arg10[%c0_28, %c0_29] : memref<16x128xbf16, #tpu.memory_space<vmem>>, vector<16x128xbf16>
      tpu.vector_store %arg10[%c0_28, %c0_29], %47 {strides = array<i32>} : memref<16x128xbf16, #tpu.memory_space<vmem>>, vector<16x128xbf16>,
      %cst_30 = arith.constant -1.000000e+30 : f32
      %49 = vector.broadcast %cst_30 : f32 to vector<16x1xf32>
      %c0_31 = arith.constant 0 : index
      %c0_32 = arith.constant 0 : index
      %50 = vector.load %arg7[%c0_31, %c0_32] : memref<16x1xf32, #tpu.memory_space<vmem>>, vector<16x1xf32>
      tpu.vector_store %arg7[%c0_31, %c0_32], %49 {strides = array<i32>} : memref<16x1xf32, #tpu.memory_space<vmem>>, vector<16x1xf32>,
      %cst_33 = arith.constant 0.000000e+00 : f32
      %51 = vector.broadcast %cst_33 : f32 to vector<16x1xf32>
      %c0_34 = arith.constant 0 : index
      %c0_35 = arith.constant 0 : index
      %52 = vector.load %arg8[%c0_34, %c0_35] : memref<16x1xf32, #tpu.memory_space<vmem>>, vector<16x1xf32>
      tpu.vector_store %arg8[%c0_34, %c0_35], %51 {strides = array<i32>} : memref<16x1xf32, #tpu.memory_space<vmem>>, vector<16x1xf32>,
      %cst_36 = arith.constant 0.000000e+00 : f32
      %53 = vector.broadcast %cst_36 : f32 to vector<16x128xf32>
      %c0_37 = arith.constant 0 : index
      %c0_38 = arith.constant 0 : index
      %54 = vector.load %arg9[%c0_37, %c0_38] : memref<16x128xf32, #tpu.memory_space<vmem>>, vector<16x128xf32>
      tpu.vector_store %arg9[%c0_37, %c0_38], %53 {strides = array<i32>} : memref<16x128xf32, #tpu.memory_space<vmem>>, vector<16x128xf32>,
    } else {
    }
    %c0 = arith.constant 0 : index
    %c0_1 = arith.constant 0 : index
    %3 = vector.load %arg3[%c0, %c0_1] : memref<16x128xf32, #tpu.memory_space<vmem>>, vector<16x128xf32>
    %c0_2 = arith.constant 0 : index
    %c0_3 = arith.constant 0 : index
    %4 = vector.load %arg5[%c0_2, %c0_3] : memref<16x1xf32, #tpu.memory_space<vmem>>, vector<16x1xf32>
    %5 = vector.broadcast %4 : vector<16x1xf32> to vector<16x128xf32>
    %6 = arith.mulf %3, %5 : vector<16x128xf32>
    %7 = arith.truncf %6 : vector<16x128xf32> to vector<16x128xbf16>
    %c0_4 = arith.constant 0 : index
    %c0_5 = arith.constant 0 : index
    %8 = vector.load %arg10[%c0_4, %c0_5] : memref<16x128xbf16, #tpu.memory_space<vmem>>, vector<16x128xbf16>
    %cst = arith.constant dense<0.000000e+00> : vector<16x16xf32>
    %9 = tpu.matmul %8, %7, %cst {dimension_numbers = #tpu.dot_dimension_numbers<[1], [1], [0], [0], [0, 0, 1, 0], [], []>} : vector<16x128xbf16>, vector<16x128xbf16>, vector<16x16xf32> -> vector<16x16xf32>
    %10 = tpu.iota {dimensions = array<i32: 1>} : vector<16x16xi32>
    %c16_i32 = arith.constant 16 : i32
    %11 = arith.muli %arg1, %c16_i32 : i32
    %12 = vector.broadcast %11 : i32 to vector<16x16xi32>
    %13 = arith.addi %10, %12 : vector<16x16xi32>
    %c8_i32 = arith.constant 8 : i32
    %14 = vector.broadcast %c8_i32 : i32 to vector<16x16xi32>
    %15 = arith.cmpi slt, %13, %14 : vector<16x16xi32>
    %cst_6 = arith.constant -1.000000e+30 : f32
    %16 = vector.broadcast %cst_6 : f32 to vector<16x16xf32>
    %17 = arith.select %15, %9, %16 : vector<16x16xi1>, vector<16x16xf32>
    %c0_7 = arith.constant 0 : index
    %c0_8 = arith.constant 0 : index
    %18 = vector.load %arg7[%c0_7, %c0_8] : memref<16x1xf32, #tpu.memory_space<vmem>>, vector<16x1xf32>
    %cst_9 = arith.constant dense<0xFF800000> : vector<16xf32>
    %19 = vector.multi_reduction <maximumf>, %17, %cst_9 [1] : vector<16x16xf32> to vector<16xf32>
    %20 = vector.shape_cast %19 : vector<16xf32> to vector<16x1xf32>
    %21 = arith.maximumf %18, %20 : vector<16x1xf32>
    %22 = arith.subf %18, %21 : vector<16x1xf32>
    %23 = math.exp %22 : vector<16x1xf32>
    %24 = vector.broadcast %21 : vector<16x1xf32> to vector<16x16xf32>
    %25 = arith.subf %17, %24 : vector<16x16xf32>
    %26 = math.exp %25 : vector<16x16xf32>
    %c0_10 = arith.constant 0 : index
    %c0_11 = arith.constant 0 : index
    %27 = vector.load %arg8[%c0_10, %c0_11] : memref<16x1xf32, #tpu.memory_space<vmem>>, vector<16x1xf32>
    %28 = arith.mulf %23, %27 : vector<16x1xf32>
    %cst_12 = arith.constant dense<0.000000e+00> : vector<16xf32>
    %29 = vector.multi_reduction <add>, %26, %cst_12 [1] : vector<16x16xf32> to vector<16xf32>
    %30 = vector.shape_cast %29 : vector<16xf32> to vector<16x1xf32>
    %31 = arith.addf %28, %30 : vector<16x1xf32>
    %c0_13 = arith.constant 0 : index
    %c0_14 = arith.constant 0 : index
    %32 = vector.load %arg8[%c0_13, %c0_14] : memref<16x1xf32, #tpu.memory_space<vmem>>, vector<16x1xf32>
    tpu.vector_store %arg8[%c0_13, %c0_14], %31 {strides = array<i32>} : memref<16x1xf32, #tpu.memory_space<vmem>>, vector<16x1xf32>,
    %c0_15 = arith.constant 0 : index
    %c0_16 = arith.constant 0 : index
    %33 = vector.load %arg9[%c0_15, %c0_16] : memref<16x128xf32, #tpu.memory_space<vmem>>, vector<16x128xf32>
    %34 = vector.broadcast %23 : vector<16x1xf32> to vector<16x128xf32>
    %35 = arith.mulf %34, %33 : vector<16x128xf32>
    %cst_17 = arith.constant dense<0.000000e+00> : vector<16x128xf32>
    %36 = tpu.matmul %26, %3, %cst_17 {dimension_numbers = #tpu.dot_dimension_numbers<[1], [0], [0], [1], [0, 0, 1, 1], [], []>} : vector<16x16xf32>, vector<16x128xf32>, vector<16x128xf32> -> vector<16x128xf32>
    %37 = arith.addf %35, %36 : vector<16x128xf32>
    %c0_18 = arith.constant 0 : index
    %c0_19 = arith.constant 0 : index
    %38 = vector.load %arg9[%c0_18, %c0_19] : memref<16x128xf32, #tpu.memory_space<vmem>>, vector<16x128xf32>
    tpu.vector_store %arg9[%c0_18, %c0_19], %37 {strides = array<i32>} : memref<16x128xf32, #tpu.memory_space<vmem>>, vector<16x128xf32>,
    %c0_20 = arith.constant 0 : index
    %c0_21 = arith.constant 0 : index
    %39 = vector.load %arg7[%c0_20, %c0_21] : memref<16x1xf32, #tpu.memory_space<vmem>>, vector<16x1xf32>
    tpu.vector_store %arg7[%c0_20, %c0_21], %21 {strides = array<i32>} : memref<16x1xf32, #tpu.memory_space<vmem>>, vector<16x1xf32>,
    %c0_i32_22 = arith.constant 0 : i32
    %40 = arith.cmpi eq, %arg1, %c0_i32_22 : i32
    %41 = arith.extui %40 : i1 to i32
    %c0_i32_23 = arith.constant 0 : i32
    %42 = arith.cmpi ne, %41, %c0_i32_23 : i32
    scf.if %42 {
      %c0_24 = arith.constant 0 : index
      %c0_25 = arith.constant 0 : index
      %43 = vector.load %arg8[%c0_24, %c0_25] : memref<16x1xf32, #tpu.memory_space<vmem>>, vector<16x1xf32>
      %44 = tpu.reciprocal %43 {approx = true} : vector<16x1xf32> -> vector<16x1xf32>
      %45 = arith.mulf %43, %44 : vector<16x1xf32>
      %cst_26 = arith.constant 2.000000e+00 : f32
      %46 = vector.broadcast %cst_26 : f32 to vector<16x1xf32>
      %47 = arith.subf %46, %45 : vector<16x1xf32>
      %48 = arith.mulf %44, %47 : vector<16x1xf32>
      %c0_27 = arith.constant 0 : index
      %c0_28 = arith.constant 0 : index
      %49 = vector.load %arg9[%c0_27, %c0_28] : memref<16x128xf32, #tpu.memory_space<vmem>>, vector<16x128xf32>
      %50 = vector.broadcast %48 : vector<16x1xf32> to vector<16x128xf32>
      %51 = arith.mulf %49, %50 : vector<16x128xf32>
      %c0_29 = arith.constant 0 : index
      %c0_30 = arith.constant 0 : index
      %52 = vector.load %arg6[%c0_29, %c0_30] : memref<16x128xf32, #tpu.memory_space<vmem>>, vector<16x128xf32>
      tpu.vector_store %arg6[%c0_29, %c0_30], %51 {strides = array<i32>} : memref<16x128xf32, #tpu.memory_space<vmem>>, vector<16x128xf32>,
    } else {
    }
    return
  }
  func.func @transform_0(%arg0: i32, %arg1: i32) -> (i32, i32) {
    %c0_i32 = arith.constant 0 : i32
    %c0_i32_0 = arith.constant 0 : i32
    return %arg0, %c0_i32 : i32, i32
  }
  func.func @transform_1(%arg0: i32, %arg1: i32) -> (i32, i32) {
    %c0_i32 = arith.constant 0 : i32
    %c0_i32_0 = arith.constant 0 : i32
    return %arg1, %c0_i32 : i32, i32
  }
  func.func @transform_2(%arg0: i32, %arg1: i32) -> (i32, i32) {
    %c0_i32 = arith.constant 0 : i32
    %c0_i32_0 = arith.constant 0 : i32
    return %arg0, %c0_i32 : i32, i32
  }
  func.func @transform_3(%arg0: i32, %arg1: i32) -> (i32, i32) {
    %c0_i32 = arith.constant 0 : i32
    %c0_i32_0 = arith.constant 0 : i32
    return %arg1, %c0_i32 : i32, i32
  }
  func.func @transform_4(%arg0: i32, %arg1: i32) -> (i32, i32) {
    %c0_i32 = arith.constant 0 : i32
    %c0_i32_0 = arith.constant 0 : i32
    return %arg0, %c0_i32 : i32, i32
  }
}

</mosaic_0001>

<llo_original>
// kernel: tpu_custom_call.1
$region0: #{tpu_custom_call.1}
  #allocation0 [shape = 'u32[]', space=smem, size = 0x4, offset = 0x4, fixed_abs, tag = 'smem constant byte address 0x4 - core index']
  #allocation1 [shape = 'u32[72,128]{1,0:T(1,128)}', space=vmem, size = 0x9000, scoped, tag = 'internal scratch']
  #allocation2 [shape = 'f32[16,1]{1,0:T(8,128)}', space=vmem, size = 0x2000, scoped, tag = 'scratch operand']
  #allocation3 [shape = 'f32[16,1]{1,0:T(8,128)}', space=vmem, size = 0x2000, scoped, tag = 'scratch operand']
  #allocation4 [shape = 'f32[16,128]{1,0:T(8,128)}', space=vmem, size = 0x2000, scoped, tag = 'scratch operand']
  #allocation5 [shape = 'bf16[16,128]{1,0:T(8,128)(2,1)}', space=vmem, size = 0x1000, scoped, tag = 'scratch operand']
  %s0 = inlined_call_operand.vmem [shape: f32[16,128], index: 0, kind: input, shape index: {}]
  %s1 = inlined_call_operand.vmem [shape: f32[16,128], index: 1, kind: input, shape index: {}]
  %s2 = inlined_call_operand.vmem [shape: f32[16,1], index: 2, kind: input, shape index: {}]
  %s3 = inlined_call_operand.vmem [shape: f32[16,1], index: 3, kind: input, shape index: {}]
  %s4 = inlined_call_operand.hbm [shape: f32[16,128], index: 4, kind: output, shape index: {}]
  %s5 = sld [smem:[#allocation0]]
  $region34: #{tpu_custom_call.1} parent=0
    _
  %s7 = ssub.s32 1, %s5
  %s8 = scalar_select 0, %s7, %s5
  $region1: #{tpu_custom_call.1} parent=0
    #allocation6 [shape = 'u8[8192]{0}', space=vmem, size = 0x2000, scoped, tag = 'output window, operand 0, single buffered']
    #allocation7 [shape = 's32[1]{0}', space=sflag, size = 0x4, scoped, tag = 'scoped memory for tpu_custom_call.1']
    %9 = vsyncpa [#allocation7], 0
    // Predicated region
    $region2: #{tpu_custom_call.1} parent=1 // pred_check
      _
    $region3: #{tpu_custom_call.1} parent=1 // pred_check_branch
      %11 = sbr.rel (0) target = $region5
    $region4: #{tpu_custom_call.1} parent=1 // pred_region
      _
    $region5: #{tpu_custom_call.1} parent=1 // pred_fallthru
      _
    // Predicated region
    $region6: #{tpu_custom_call.1} parent=1 // pred_check
      _
    $region7: #{tpu_custom_call.1} parent=1 // pred_check_branch
      %13 = sbr.rel (0) target = $region9
    $region8: #{tpu_custom_call.1} parent=1 // pred_region
      _
    $region9: #{tpu_custom_call.1} parent=1 // pred_fallthru
      _
    // Predicated region
    $region10: #{tpu_custom_call.1} parent=1 // pred_check
      _
    $region11: #{tpu_custom_call.1} parent=1 // pred_check_branch
      %15 = sbr.rel (0) target = $region13
    $region12: #{tpu_custom_call.1} parent=1 // pred_region
      _
    $region13: #{tpu_custom_call.1} parent=1 // pred_fallthru
      _
    // Predicated region
    $region14: #{tpu_custom_call.1} parent=1 // pred_check
      _
    $region15: #{tpu_custom_call.1} parent=1 // pred_check_branch
      %17 = sbr.rel (0) target = $region17
    $region16: #{tpu_custom_call.1} parent=1 // pred_region
      _
    $region17: #{tpu_custom_call.1} parent=1 // pred_fallthru
      _
    %p19 = scmp.eq.s32.totalorder 0, 0
    // Predicated region
    $region18: #{tpu_custom_call.1} parent=1 // pred_check
      %p20 = pneg %p19
    $region19: #{tpu_custom_call.1} parent=1 // pred_check_branch
      %22 = sbr.rel (%p20) target = $region21
    $region20: #{tpu_custom_call.1} parent=1 // pred_region
      %v23 = vld [vmem:[%s0] sm:$0xff]
      %v24 = vld [vmem:[%s0 + $0x8] sm:$0xff]
      %v25 = vld [vmem:[%s2] sm:$0xff]
      %v26 = vld [vmem:[%s2 + $0x8] sm:$0xff]
      %28 = vset.pattern.permute.xlu0 0
      %29 = vperm.xlu0 %28, %v25
      %v30 = vpop.permute.xlu0 %29
      %33 = vset.pattern.permute.xlu0 0
      %34 = vperm.xlu0 %33, %v26
      %v35 = vpop.permute.xlu0 %34
      %v37 = vmul.f32 %v23, %v30
      %v38 = vmul.f32 %v24, %v35
      %v39 = vpack.c.bf16 %v37, %v37
      %v40 = vpack.c.bf16 %v38, %v38
      %41 = vst [vmem:[#allocation5] sm:$0xf] %v39
      %42 = vst [vmem:[#allocation5 + $0x4] sm:$0xf] %v40
      %vm43 = vcmask 7168
      %44 = vst.msk [vmem:[#allocation2] sm:$0xff] %vm43, -1e+30
      %45 = vst.msk [vmem:[#allocation2 + $0x8] sm:$0xff] %vm43, -1e+30
      %46 = vst.msk [vmem:[#allocation3] sm:$0xff] %vm43, 0.0
      %47 = vst.msk [vmem:[#allocation3 + $0x8] sm:$0xff] %vm43, 0.0
      %48 = vst [vmem:[#allocation4] sm:$0xff] 0.0
      %49 = vst [vmem:[#allocation4 + $0x8] sm:$0xff] 0.0
    $region21: #{tpu_custom_call.1} parent=1 // pred_fallthru
      _
    %v50 = vld [vmem:[%s1] sm:$0xff]
    %v51 = vld [vmem:[%s1 + $0x8] sm:$0xff]
    %v52 = vld [vmem:[%s3] sm:$0xff]
    %v53 = vld [vmem:[%s3 + $0x8] sm:$0xff]
    %55 = vset.pattern.permute.xlu0 0
    %56 = vperm.xlu0 %55, %v52
    %v57 = vpop.permute.xlu0 %56
    %60 = vset.pattern.permute.xlu0 0
    %61 = vperm.xlu0 %60, %v53
    %v62 = vpop.permute.xlu0 %61
    %v64 = vmul.f32 %v50, %v57
    %v65 = vmul.f32 %v51, %v62
    %v66 = vpack.c.bf16 %v65, %v64
    %v67 = vld [vmem:[#allocation5] sm:$0xf]
    %v68 = vld [vmem:[#allocation5 + $0x4] sm:$0xf]
    %v71 = vunpack.c.l.b16 %v67
    %v72 = vunpack.c.l.b16 %v68
    %v73 = vpack.c.b16 %v72, %v71
    %75 = vmatpush.bf16.xpose.msra.mxu0 0
    %76 = vmatpush.bf16.xpose.msra.mxu0 0
    %77 = vmatpush.bf16.xpose.msra.mxu0 0
    %78 = vmatpush.bf16.xpose.msra.mxu0 0
    %79 = vmatpush.bf16.xpose.msra.mxu0 0
    %80 = vmatpush.bf16.xpose.msra.mxu0 0
    %81 = vmatpush.bf16.xpose.msra.mxu0 0
    %82 = vmatpush.bf16.xpose.msra.mxu0 %v66
    %83 = vmatmul.bf16.gmra.mxu0 %v73
    %v84 = vpop.f32.mrf.mxu0
    %v85 = vadd.f32 0.0, %v84
    %v86 = vpop.f32.mrf.mxu0
    %v87 = vadd.f32 0.0, %v86
    %88 = vdwg.mxu0
    %v89 = vlaneseq
    %v90 = vand.u32 %v89, 127
    %s91 = smul.u32 0, 16
    %v92 = vstv %s91
    %v93 = vadd.s32 %v90, %v92
    %vm94 = vcmp.lt.s32.totalorder %v93, 8
    %v95 = vsel %vm94, %v85, -1e+30
    %v96 = vsel %vm94, %v87, -1e+30
    %v97 = vld [vmem:[#allocation2] sm:$0xff]
    %v98 = vld [vmem:[#allocation2 + $0x8] sm:$0xff]
    %vm99 = vcmask 130048
    %v100 = vsel %vm99, %v95, -inf
    %101 = vmax.xlane.f32.xlu0 %v100
    %v102 = vpop.xlane.xlu0 %101
    %v103 = vsel %vm99, %v96, -inf
    %104 = vmax.xlane.f32.xlu0 %v103
    %v105 = vpop.xlane.xlu0 %104
    %v106 = vmax.f32 %v97, %v102
    %v107 = vmax.f32 %v98, %v105
    %v108 = vsub.f32 %v97, %v106
    %v109 = vsub.f32 %v98, %v107
    %v110 = vmul.f32 %v108, 1.442695
    %v111 = vpow.pop %v110
    %v112 = vmul.f32 %v109, 1.442695
    %v113 = vpow.pop %v112
    %115 = vset.pattern.permute.xlu0 0
    %116 = vperm.xlu0 %115, %v106
    %v117 = vpop.permute.xlu0 %116
    %120 = vset.pattern.permute.xlu0 0
    %121 = vperm.xlu0 %120, %v107
    %v122 = vpop.permute.xlu0 %121
    %v124 = vsub.f32 %v95, %v117
    %v125 = vsub.f32 %v96, %v122
    %v126 = vmul.f32 %v124, 1.442695
    %v127 = vpow.pop %v126
    %v128 = vmul.f32 %v125, 1.442695
    %v129 = vpow.pop %v128
    %v130 = vld [vmem:[#allocation3] sm:$0xff]
    %v131 = vld [vmem:[#allocation3 + $0x8] sm:$0xff]
    %v132 = vmul.f32 %v111, %v130
    %v133 = vmul.f32 %v113, %v131
    %v134 = vsel %vm99, %v127, 0.0
    %135 = vadd.xlane.f32.xlu0 %v134
    %v136 = vpop.xlane.xlu0 %135
    %v137 = vsel %vm99, %v129, 0.0
    %138 = vadd.xlane.f32.xlu0 %v137
    %v139 = vpop.xlane.xlu0 %138
    %v140 = vadd.f32 %v132, %v136
    %v141 = vadd.f32 %v133, %v139
    %vm142 = vcmask 7168
    %143 = vst.msk [vmem:[#allocation3] sm:$0xff] %vm142, %v140
    %144 = vst.msk [vmem:[#allocation3 + $0x8] sm:$0xff] %vm142, %v141
    %v145 = vld [vmem:[#allocation4] sm:$0xff]
    %v146 = vld [vmem:[#allocation4 + $0x8] sm:$0xff]
    %148 = vset.pattern.permute.xlu0 0
    %149 = vperm.xlu0 %148, %v111
    %v150 = vpop.permute.xlu0 %149
    %153 = vset.pattern.permute.xlu0 0
    %154 = vperm.xlu0 %153, %v113
    %v155 = vpop.permute.xlu0 %154
    %v157 = vmul.f32 %v150, %v145
    %v158 = vmul.f32 %v155, %v146
    %v160 = vsel %vm99, %v127, 0
    %v163 = vsel %vm99, %v129, 0
    %165 = vmatpush.msra.mxu0 0.0
    %166 = vmatpush.msra.mxu0 0.0
    %167 = vmatpush.msra.mxu0 0.0
    %168 = vmatpush.msra.mxu0 0.0
    %169 = vmatpush.msra.mxu0 0.0
    %170 = vmatpush.msra.mxu0 0.0
    %171 = vmatpush.msra.mxu0 0.0
    %172 = vmatpush.msra.mxu0 0.0
    %173 = vmatpush.msra.mxu0 0.0
    %174 = vmatpush.msra.mxu0 0.0
    %175 = vmatpush.msra.mxu0 0.0
    %176 = vmatpush.msra.mxu0 0.0
    %177 = vmatpush.msra.mxu0 0.0
    %178 = vmatpush.msra.mxu0 0.0
    %179 = vmatpush.msra.mxu0 %v51
    %180 = vmatpush.msra.mxu0 %v50
    %181 = vmatmul.f32.gmra.mxu0 %v160
    %v182 = vpop.f32.mrf.mxu0
    %v183 = vadd.f32 0.0, %v182
    %184 = vmatmul.f32.gmra.mxu0 %v163
    %v185 = vpop.f32.mrf.mxu0
    %v186 = vadd.f32 0.0, %v185
    %187 = vdwg.mxu0
    %v188 = vadd.f32 %v157, %v183
    %v189 = vadd.f32 %v158, %v186
    %190 = vst [vmem:[#allocation4] sm:$0xff] %v188
    %191 = vst [vmem:[#allocation4 + $0x8] sm:$0xff] %v189
    %192 = vst.msk [vmem:[#allocation2] sm:$0xff] %vm142, %v106
    %193 = vst.msk [vmem:[#allocation2 + $0x8] sm:$0xff] %vm142, %v107
    // Predicated region
    $region22: #{tpu_custom_call.1} parent=1 // pred_check
      %p194 = pneg %p19
    $region23: #{tpu_custom_call.1} parent=1 // pred_check_branch
      %196 = sbr.rel (%p194) target = $region25
    $region24: #{tpu_custom_call.1} parent=1 // pred_region
      %v197 = vld [vmem:[#allocation3] sm:$0xff]
      %v198 = vld [vmem:[#allocation3 + $0x8] sm:$0xff]
      %v199 = vrcp.pop %v197
      %v200 = vrcp.pop %v198
      %v201 = vmul.f32 %v197, %v199
      %v202 = vmul.f32 %v198, %v200
      %v203 = vsub.f32 2.0, %v201
      %v204 = vsub.f32 2.0, %v202
      %v205 = vmul.f32 %v199, %v203
      %v206 = vmul.f32 %v200, %v204
      %v207 = vld [vmem:[#allocation4] sm:$0xff]
      %v208 = vld [vmem:[#allocation4 + $0x8] sm:$0xff]
      %210 = vset.pattern.permute.xlu0 0
      %211 = vperm.xlu0 %210, %v205
      %v212 = vpop.permute.xlu0 %211
      %215 = vset.pattern.permute.xlu0 0
      %216 = vperm.xlu0 %215, %v206
      %v217 = vpop.permute.xlu0 %216
      %v219 = vmul.f32 %v207, %v212
      %v220 = vmul.f32 %v208, %v217
      %221 = vst [vmem:[#allocation6] sm:$0xff] %v219
      %222 = vst [vmem:[#allocation6 + $0x8] sm:$0xff] %v220
    $region25: #{tpu_custom_call.1} parent=1 // pred_fallthru
      _
    // Predicated region
    $region26: #{tpu_custom_call.1} parent=1 // pred_check
      _
    $region27: #{tpu_custom_call.1} parent=1 // pred_check_branch
      %224 = sbr.rel (0) target = $region29
    $region28: #{tpu_custom_call.1} parent=1 // pred_region
      %226 = vsyncadd [#allocation7], 0
      %s227 = sshll.u32 [#allocation6], 4
      %s228 = int_to_ptr.vmem [resolvable:$true] %s227
      %s229 = sshll.u32 %s4, 4
      %s230 = int_to_ptr.hbm [resolvable:$true] %s229
      %235 = dma.vmem_to_hbm [thread:$0]  %s228, 256, %s230, [#allocation7], 128, 128, 8
    $region29: #{tpu_custom_call.1} parent=1 // pred_fallthru
      _
    // Predicated region
    $region30: #{tpu_custom_call.1} parent=1 // pred_check
      _
    $region31: #{tpu_custom_call.1} parent=1 // pred_check_branch
      %237 = sbr.rel (0) target = $region33
    $region32: #{tpu_custom_call.1} parent=1 // pred_region
      %239 = dma.done [#allocation7], 256
    $region33: #{tpu_custom_call.1} parent=1 // pred_fallthru
      _
    %240 = vsyncpa [#allocation7], 1

</llo_original>
